<compile_context>
chip_gen: v5e
topology: v5e:2x2
jax: 0.10.0
libtpu: 0.0.40
codegen_flags: <defaults>
</compile_context>

<pallas_src>
import functools

import jax
import jax.numpy as jnp
from jax.experimental import pallas as pl
from jax.experimental.pallas import tpu as pltpu

LANE = 128

# --- domain-tuned sine --------------------------------------------------------
_INV_PI = 0.3183098861837907
_PI_HI = 3.140625                    # 12-bit head: k*PI_HI exact for |k| < 2^12
_PI_LO = 9.6765358979323846e-04      # pi - PI_HI


def _sin_bounded(x):
    """sin(x) for moderately bounded x (|x| <~ 1e3), tuned for the TPU VPU.

    Round-to-nearest multiple of pi (2-term Cody-Waite reduction) + degree-11
    odd Taylor polynomial on [-pi/2, pi/2] (max abs err ~6e-8), sign flip from
    the parity of the quotient. Roughly half the VALU ops of XLA's generic sin.
    """
    k = jnp.floor(x * _INV_PI + 0.5)          # nearest integer quotient
    r = x - k * _PI_HI
    r = r - k * _PI_LO                        # r in [-pi/2, pi/2]
    r2 = r * r
    p = jnp.float32(-2.5052108385441718775e-08)          # -1/11!
    p = p * r2 + jnp.float32(2.7557319223985890653e-06)  # +1/9!
    p = p * r2 + jnp.float32(-1.9841269841269841253e-04) # -1/7!
    p = p * r2 + jnp.float32(8.3333333333333332177e-03)  # +1/5!
    p = p * r2 + jnp.float32(-1.6666666666666666574e-01) # -1/3!
    s = r + (r * r2) * p
    odd = (k.astype(jnp.int32) & 1) == 1                 # (-1)^k
    return jnp.where(odd, -s, s)


# --- kernel -------------------------------------------------------------------
def _siren_kernel(x_ref, w_ref, b_ref, wf_ref, bf_ref, o_ref, *, num_layers):
    # x_ref:  (TILE, HP)        lane-packed input tile
    # w_ref:  (L, HP, HP)       block-diagonal sine-layer weights (omega folded in)
    # b_ref:  (L, 1, HP)        tiled sine-layer biases (omega folded in)
    # wf_ref: (HP, OUTP)        block-diagonal final linear weight (OUTP = pack*OUT, dense)
    # bf_ref: (1, OUTP)         tiled final bias
    # o_ref:  (TILE, OUTP)      densely packed output
    h = x_ref[...]
    for l in range(num_layers):  # static unroll; num_layers is small
        z = jnp.dot(h, w_ref[l], preferred_element_type=jnp.float32) + b_ref[l]
        h = _sin_bounded(z)
    out = jnp.dot(h, wf_ref[...], preferred_element_type=jnp.float32) + bf_ref[...]
    o_ref[...] = out.astype(o_ref.dtype)


# --- parameter packing --------------------------------------------------------
def pack_siren_params(ws, bs, wf, bf, *, omega_0=30.0):
    """One-time parameter transform for the fused kernel.

    - Folds omega_0 into the sine-layer weights/biases (final linear untouched).
    - Lane-packs `pack = 128 // H` row-groups via block-diagonal weights so the
      hidden state fills a full 128-lane vreg.
    - Final linear is packed densely: group g writes output lanes
      [g*OUT, (g+1)*OUT) -> packed output row reshapes directly to (pack, OUT).
    """
    L, H, _ = ws.shape
    OUT = wf.shape[1]
    pack = LANE // H if (H <= LANE and LANE % H == 0) else 1

    ws_f = ws * omega_0
    bs_f = bs * omega_0

    eye = jnp.eye(pack, dtype=ws.dtype)
    # block-diagonal: [l, g*H+i, k*H+o] = I[g,k] * W_f[l, i, o]
    ws_p = jnp.einsum("gk,lio->lgiko", eye, ws_f).reshape(L, pack * H, pack * H)
    bs_p = jnp.tile(bs_f, (1, 1, pack))                           # (L, 1, pack*H)

    # Dense packed final linear: no lane padding -> 4x fewer output bytes.
    wf_p = jnp.einsum("gk,io->giko", eye, wf).reshape(pack * H, pack * OUT)
    bf_p = jnp.tile(bf, (1, pack))                                # (1, pack*OUT)

    return ws_p, bs_p, wf_p, bf_p, pack, OUT


# --- forward wrapper ----------------------------------------------------------
def siren_forward(x, ws_p, bs_p, wf_p, bf_p, *, pack, out_features, max_tile=4096):
    """x: (N, H) float32. Packed params from pack_siren_params. Returns (N, out_features).

    Call this under jax.jit so the input pad/reshape packing fuses into a single
    pass (it is a free metadata reshape when N % pack == 0 and no tile padding
    is needed).
    """
    N, H = x.shape
    L, HP, _ = ws_p.shape
    OUTP = wf_p.shape[1]
    assert HP == pack * H
    assert OUTP == pack * out_features

    # --- balanced tile selection over *packed* rows ---------------------------
    # Choose the number of tiles first, then divide: padding is capped at a few
    # rows (not up to tile-1). Force >= 2 grid steps when there is enough work
    # so the "parallel" row axis can be sharded across v7x's two TensorCores
    # (v5e/v6e have one TC; the extra step costs ~0.35 us, negligible).
    rows_raw = pl.cdiv(N, pack)
    num_tiles = pl.cdiv(rows_raw, max_tile)
    if rows_raw >= 16:
        num_tiles = max(num_tiles, 2)
    tile = pl.cdiv(rows_raw, num_tiles)
    tile = pl.cdiv(tile, 8) * 8                 # sublane alignment
    num_tiles = pl.cdiv(rows_raw, tile)
    rows = num_tiles * tile
    n_pad = rows * pack

    xp = x if n_pad == N else jnp.pad(x, ((0, n_pad - N), (0, 0)))
    xp = xp.reshape(rows, HP)                   # lane-pack `pack` rows per packed row

    kernel = functools.partial(_siren_kernel, num_layers=L)

    out_p = pl.pallas_call(
        kernel,
        out_shape=jax.ShapeDtypeStruct((rows, OUTP), x.dtype),
        grid_spec=pltpu.PrefetchScalarGridSpec(
            num_scalar_prefetch=0,
            grid=(num_tiles,),
            in_specs=[
                pl.BlockSpec((tile, HP), lambda i: (i, 0)),
                # constant block index -> weights DMA'd once, VMEM-resident
                pl.BlockSpec((L, HP, HP), lambda i: (0, 0, 0)),
                pl.BlockSpec((L, 1, HP), lambda i: (0, 0, 0)),
                pl.BlockSpec((HP, OUTP), lambda i: (0, 0)),
                pl.BlockSpec((1, OUTP), lambda i: (0, 0)),
            ],
            out_specs=pl.BlockSpec((tile, OUTP), lambda i: (i, 0)),
        ),
        compiler_params=pltpu.CompilerParams(
            dimension_semantics=("parallel",),
            # Above the 16 MiB (v5e) / 32 MiB (v6e, v7x) scoped defaults so a
            # 4096-row tile fits comfortably; well under v7x's 64 MiB physical.
            vmem_limit_bytes=48 * 1024 * 1024,
        ),
    )(xp, ws_p, bs_p, wf_p, bf_p)

    # Dense unpack: (rows, pack*OUT) -> (rows*pack, OUT) is a contiguous,
    # zero-copy reshape; just drop the padded rows.
    return out_p.reshape(rows * pack, out_features)[:N]


# --- init + reference ---------------------------------------------------------
def init_siren_params(key, hidden_features, num_layers, out_dim, omega_0=30.0):
    """Deterministic init mirroring the PyTorch module's init scheme.

    Returns weights already transposed to (in, out) layout (raw, un-folded).
    """
    H = hidden_features
    OUT = out_dim * 2
    ks = jax.random.split(key, 2 * num_layers + 2)

    ws = []
    bs = []
    for l in range(num_layers):
        if l == 0:
            bound_w = 1.0 / H                       # is_first=True
        else:
            bound_w = jnp.sqrt(6.0 / H) / omega_0   # is_first=False
        # PyTorch nn.Linear default bias init: U(-1/sqrt(in), 1/sqrt(in))
        bound_b = 1.0 / jnp.sqrt(H)
        w = jax.random.uniform(ks[2 * l], (H, H), jnp.float32, -bound_w, bound_w)
        b = jax.random.uniform(ks[2 * l + 1], (1, H), jnp.float32, -bound_b, bound_b)
        ws.append(w.T)  # (in, out)
        bs.append(b)
    ws = jnp.stack(ws, axis=0)                      # (L, H, H)
    bs = jnp.stack(bs, axis=0)                      # (L, 1, H)

    bound_wf = jnp.sqrt(6.0 / H) / omega_0
    bound_bf = 1.0 / jnp.sqrt(H)
    wf = jax.random.uniform(ks[-2], (OUT, H), jnp.float32, -bound_wf, bound_wf).T  # (H, OUT)
    bf = jax.random.uniform(ks[-1], (1, OUT), jnp.float32, -bound_bf, bound_bf)
    return ws, bs, wf, bf


def siren_reference(x, ws, bs, wf, bf, omega_0=30.0):
    h = x
    for l in range(ws.shape[0]):
        h = jnp.sin(omega_0 * (h @ ws[l] + bs[l]))
    return h @ wf + bf


if __name__ == "__main__":
    hidden_features = 32
    num_layers = 3
    out_dim = 4
    omega_0 = 30.0
    N = 256  # number of coordinate samples / feature rows

    key = jax.random.PRNGKey(0)
    k_x, k_p = jax.random.split(key)
    x = jax.random.uniform(k_x, (N, hidden_features), jnp.float32, -1.0, 1.0)
    ws, bs, wf, bf = init_siren_params(k_p, hidden_features, num_layers, out_dim, omega_0)

    # One-time transform: fold omega_0 + lane-pack into block-diagonal weights.
    ws_p, bs_p, wf_p, bf_p, pack, out_features = pack_siren_params(
        ws, bs, wf, bf, omega_0=omega_0)

    # jit the whole wrapper so the input pack (pad+reshape) and output unpack
    # fuse around the pallas_call instead of being separate HBM passes.
    fwd = jax.jit(functools.partial(
        siren_forward, pack=pack, out_features=out_features))
    out = jax.block_until_ready(fwd(x, ws_p, bs_p, wf_p, bf_p))

    ref = siren_reference(x, ws, bs, wf, bf, omega_0=omega_0)
    assert out.shape == (N, out_dim * 2), out.shape
    max_err = float(jnp.abs(out - ref).max())
    assert jnp.allclose(out, ref, atol=1e-4, rtol=1e-4), max_err

    print("KERNEL_OK")
</pallas_src>

<mosaic_0001>
module attributes {stable_mosaic.version = 11 : i64} {
  func.func @_siren_kernel(%arg0: i32, %arg1: memref<32x128xf32, #tpu.memory_space<vmem>>, %arg2: memref<3x128x128xf32, #tpu.memory_space<vmem>>, %arg3: memref<3x1x128xf32, #tpu.memory_space<vmem>>, %arg4: memref<128x32xf32, #tpu.memory_space<vmem>>, %arg5: memref<1x32xf32, #tpu.memory_space<vmem>>, %arg6: memref<32x32xf32, #tpu.memory_space<vmem>>) attributes {dimension_semantics = [#tpu.dimension_semantics<parallel>], iteration_bounds = array<i64: 2>, scalar_prefetch = 0 : i64, scratch_operands = 0 : i64, tpu.core_type = #tpu.core_type<tc>, window_params = [{transform_indices = @transform_0, window_bounds = array<i64: 32, 128>}, {pipeline_mode = #tpu.pipeline_mode<synchronous>, transform_indices = @transform_1, window_bounds = array<i64: 3, 128, 128>}, {pipeline_mode = #tpu.pipeline_mode<synchronous>, transform_indices = @transform_2, window_bounds = array<i64: 3, 1, 128>}, {pipeline_mode = #tpu.pipeline_mode<synchronous>, transform_indices = @transform_3, window_bounds = array<i64: 128, 32>}, {pipeline_mode = #tpu.pipeline_mode<synchronous>, transform_indices = @transform_4, window_bounds = array<i64: 1, 32>}, {transform_indices = @transform_5, window_bounds = array<i64: 32, 32>}]} {
    %c0 = arith.constant 0 : index
    %c0_0 = arith.constant 0 : index
    %0 = vector.load %arg1[%c0, %c0_0] : memref<32x128xf32, #tpu.memory_space<vmem>>, vector<32x128xf32>
    %c0_1 = arith.constant 0 : index
    %c0_2 = arith.constant 0 : index
    %c0_3 = arith.constant 0 : index
    %1 = vector.load %arg2[%c0_1, %c0_2, %c0_3] : memref<3x128x128xf32, #tpu.memory_space<vmem>>, vector<1x128x128xf32>
    %2 = vector.shape_cast %1 : vector<1x128x128xf32> to vector<128x128xf32>
    %cst = arith.constant dense<0.000000e+00> : vector<32x128xf32>
    %3 = tpu.matmul %0, %2, %cst {dimension_numbers = #tpu.dot_dimension_numbers<[1], [0], [0], [1], [0, 0, 1, 1], [], []>} : vector<32x128xf32>, vector<128x128xf32>, vector<32x128xf32> -> vector<32x128xf32>
    %c0_4 = arith.constant 0 : index
    %c0_5 = arith.constant 0 : index
    %c0_6 = arith.constant 0 : index
    %4 = vector.load %arg3[%c0_4, %c0_5, %c0_6] : memref<3x1x128xf32, #tpu.memory_space<vmem>>, vector<1x1x128xf32>
    %5 = vector.shape_cast %4 : vector<1x1x128xf32> to vector<1x128xf32>
    %6 = vector.broadcast %5 : vector<1x128xf32> to vector<32x128xf32>
    %7 = arith.addf %3, %6 : vector<32x128xf32>
    %cst_7 = arith.constant 0.318309873 : f32
    %8 = vector.broadcast %cst_7 : f32 to vector<32x128xf32>
    %9 = arith.mulf %7, %8 : vector<32x128xf32>
    %cst_8 = arith.constant 5.000000e-01 : f32
    %10 = vector.broadcast %cst_8 : f32 to vector<32x128xf32>
    %11 = arith.addf %9, %10 : vector<32x128xf32>
    %12 = math.floor %11 : vector<32x128xf32>
    %cst_9 = arith.constant 3.140625 : f32
    %13 = vector.broadcast %cst_9 : f32 to vector<32x128xf32>
    %14 = arith.mulf %12, %13 : vector<32x128xf32>
    %15 = arith.subf %7, %14 : vector<32x128xf32>
    %cst_10 = arith.constant 9.67653584E-4 : f32
    %16 = vector.broadcast %cst_10 : f32 to vector<32x128xf32>
    %17 = arith.mulf %12, %16 : vector<32x128xf32>
    %18 = arith.subf %15, %17 : vector<32x128xf32>
    %19 = arith.mulf %18, %18 : vector<32x128xf32>
    %cst_11 = arith.constant -2.50521079E-8 : f32
    %20 = vector.broadcast %cst_11 : f32 to vector<32x128xf32>
    %21 = arith.mulf %20, %19 : vector<32x128xf32>
    %cst_12 = arith.constant 2.75573188E-6 : f32
    %22 = vector.broadcast %cst_12 : f32 to vector<32x128xf32>
    %23 = arith.addf %21, %22 : vector<32x128xf32>
    %24 = arith.mulf %23, %19 : vector<32x128xf32>
    %cst_13 = arith.constant -1.98412701E-4 : f32
    %25 = vector.broadcast %cst_13 : f32 to vector<32x128xf32>
    %26 = arith.addf %24, %25 : vector<32x128xf32>
    %27 = arith.mulf %26, %19 : vector<32x128xf32>
    %cst_14 = arith.constant 0.00833333377 : f32
    %28 = vector.broadcast %cst_14 : f32 to vector<32x128xf32>
    %29 = arith.addf %27, %28 : vector<32x128xf32>
    %30 = arith.mulf %29, %19 : vector<32x128xf32>
    %cst_15 = arith.constant -0.166666672 : f32
    %31 = vector.broadcast %cst_15 : f32 to vector<32x128xf32>
    %32 = arith.addf %30, %31 : vector<32x128xf32>
    %33 = arith.mulf %18, %19 : vector<32x128xf32>
    %34 = arith.mulf %33, %32 : vector<32x128xf32>
    %35 = arith.addf %18, %34 : vector<32x128xf32>
    %36 = arith.fptosi %12 : vector<32x128xf32> to vector<32x128xi32>
    %c1_i32 = arith.constant 1 : i32
    %37 = vector.broadcast %c1_i32 : i32 to vector<32x128xi32>
    %38 = arith.andi %36, %37 : vector<32x128xi32>
    %c1_i32_16 = arith.constant 1 : i32
    %39 = vector.broadcast %c1_i32_16 : i32 to vector<32x128xi32>
    %40 = arith.cmpi eq, %38, %39 : vector<32x128xi32>
    %cst_17 = arith.constant 0.000000e+00 : f32
    %41 = vector.broadcast %cst_17 : f32 to vector<32x128xf32>
    %42 = arith.subf %41, %35 : vector<32x128xf32>
    %43 = arith.select %40, %42, %35 : vector<32x128xi1>, vector<32x128xf32>
    %c1 = arith.constant 1 : index
    %c0_18 = arith.constant 0 : index
    %c0_19 = arith.constant 0 : index
    %44 = vector.load %arg2[%c1, %c0_18, %c0_19] : memref<3x128x128xf32, #tpu.memory_space<vmem>>, vector<1x128x128xf32>
    %45 = vector.shape_cast %44 : vector<1x128x128xf32> to vector<128x128xf32>
    %cst_20 = arith.constant dense<0.000000e+00> : vector<32x128xf32>
    %46 = tpu.matmul %43, %45, %cst_20 {dimension_numbers = #tpu.dot_dimension_numbers<[1], [0], [0], [1], [0, 0, 1, 1], [], []>} : vector<32x128xf32>, vector<128x128xf32>, vector<32x128xf32> -> vector<32x128xf32>
    %c1_21 = arith.constant 1 : index
    %c0_22 = arith.constant 0 : index
    %c0_23 = arith.constant 0 : index
    %47 = vector.load %arg3[%c1_21, %c0_22, %c0_23] : memref<3x1x128xf32, #tpu.memory_space<vmem>>, vector<1x1x128xf32>
    %48 = vector.shape_cast %47 : vector<1x1x128xf32> to vector<1x128xf32>
    %49 = vector.broadcast %48 : vector<1x128xf32> to vector<32x128xf32>
    %50 = arith.addf %46, %49 : vector<32x128xf32>
    %cst_24 = arith.constant 0.318309873 : f32
    %51 = vector.broadcast %cst_24 : f32 to vector<32x128xf32>
    %52 = arith.mulf %50, %51 : vector<32x128xf32>
    %cst_25 = arith.constant 5.000000e-01 : f32
    %53 = vector.broadcast %cst_25 : f32 to vector<32x128xf32>
    %54 = arith.addf %52, %53 : vector<32x128xf32>
    %55 = math.floor %54 : vector<32x128xf32>
    %cst_26 = arith.constant 3.140625 : f32
    %56 = vector.broadcast %cst_26 : f32 to vector<32x128xf32>
    %57 = arith.mulf %55, %56 : vector<32x128xf32>
    %58 = arith.subf %50, %57 : vector<32x128xf32>
    %cst_27 = arith.constant 9.67653584E-4 : f32
    %59 = vector.broadcast %cst_27 : f32 to vector<32x128xf32>
    %60 = arith.mulf %55, %59 : vector<32x128xf32>
    %61 = arith.subf %58, %60 : vector<32x128xf32>
    %62 = arith.mulf %61, %61 : vector<32x128xf32>
    %cst_28 = arith.constant -2.50521079E-8 : f32
    %63 = vector.broadcast %cst_28 : f32 to vector<32x128xf32>
    %64 = arith.mulf %63, %62 : vector<32x128xf32>
    %cst_29 = arith.constant 2.75573188E-6 : f32
    %65 = vector.broadcast %cst_29 : f32 to vector<32x128xf32>
    %66 = arith.addf %64, %65 : vector<32x128xf32>
    %67 = arith.mulf %66, %62 : vector<32x128xf32>
    %cst_30 = arith.constant -1.98412701E-4 : f32
    %68 = vector.broadcast %cst_30 : f32 to vector<32x128xf32>
    %69 = arith.addf %67, %68 : vector<32x128xf32>
    %70 = arith.mulf %69, %62 : vector<32x128xf32>
    %cst_31 = arith.constant 0.00833333377 : f32
    %71 = vector.broadcast %cst_31 : f32 to vector<32x128xf32>
    %72 = arith.addf %70, %71 : vector<32x128xf32>
    %73 = arith.mulf %72, %62 : vector<32x128xf32>
    %cst_32 = arith.constant -0.166666672 : f32
    %74 = vector.broadcast %cst_32 : f32 to vector<32x128xf32>
    %75 = arith.addf %73, %74 : vector<32x128xf32>
    %76 = arith.mulf %61, %62 : vector<32x128xf32>
    %77 = arith.mulf %76, %75 : vector<32x128xf32>
    %78 = arith.addf %61, %77 : vector<32x128xf32>
    %79 = arith.fptosi %55 : vector<32x128xf32> to vector<32x128xi32>
    %c1_i32_33 = arith.constant 1 : i32
    %80 = vector.broadcast %c1_i32_33 : i32 to vector<32x128xi32>
    %81 = arith.andi %79, %80 : vector<32x128xi32>
    %c1_i32_34 = arith.constant 1 : i32
    %82 = vector.broadcast %c1_i32_34 : i32 to vector<32x128xi32>
    %83 = arith.cmpi eq, %81, %82 : vector<32x128xi32>
    %cst_35 = arith.constant 0.000000e+00 : f32
    %84 = vector.broadcast %cst_35 : f32 to vector<32x128xf32>
    %85 = arith.subf %84, %78 : vector<32x128xf32>
    %86 = arith.select %83, %85, %78 : vector<32x128xi1>, vector<32x128xf32>
    %c2 = arith.constant 2 : index
    %c0_36 = arith.constant 0 : index
    %c0_37 = arith.constant 0 : index
    %87 = vector.load %arg2[%c2, %c0_36, %c0_37] : memref<3x128x128xf32, #tpu.memory_space<vmem>>, vector<1x128x128xf32>
    %88 = vector.shape_cast %87 : vector<1x128x128xf32> to vector<128x128xf32>
    %cst_38 = arith.constant dense<0.000000e+00> : vector<32x128xf32>
    %89 = tpu.matmul %86, %88, %cst_38 {dimension_numbers = #tpu.dot_dimension_numbers<[1], [0], [0], [1], [0, 0, 1, 1], [], []>} : vector<32x128xf32>, vector<128x128xf32>, vector<32x128xf32> -> vector<32x128xf32>
    %c2_39 = arith.constant 2 : index
    %c0_40 = arith.constant 0 : index
    %c0_41 = arith.constant 0 : index
    %90 = vector.load %arg3[%c2_39, %c0_40, %c0_41] : memref<3x1x128xf32, #tpu.memory_space<vmem>>, vector<1x1x128xf32>
    %91 = vector.shape_cast %90 : vector<1x1x128xf32> to vector<1x128xf32>
    %92 = vector.broadcast %91 : vector<1x128xf32> to vector<32x128xf32>
    %93 = arith.addf %89, %92 : vector<32x128xf32>
    %cst_42 = arith.constant 0.318309873 : f32
    %94 = vector.broadcast %cst_42 : f32 to vector<32x128xf32>
    %95 = arith.mulf %93, %94 : vector<32x128xf32>
    %cst_43 = arith.constant 5.000000e-01 : f32
    %96 = vector.broadcast %cst_43 : f32 to vector<32x128xf32>
    %97 = arith.addf %95, %96 : vector<32x128xf32>
    %98 = math.floor %97 : vector<32x128xf32>
    %cst_44 = arith.constant 3.140625 : f32
    %99 = vector.broadcast %cst_44 : f32 to vector<32x128xf32>
    %100 = arith.mulf %98, %99 : vector<32x128xf32>
    %101 = arith.subf %93, %100 : vector<32x128xf32>
    %cst_45 = arith.constant 9.67653584E-4 : f32
    %102 = vector.broadcast %cst_45 : f32 to vector<32x128xf32>
    %103 = arith.mulf %98, %102 : vector<32x128xf32>
    %104 = arith.subf %101, %103 : vector<32x128xf32>
    %105 = arith.mulf %104, %104 : vector<32x128xf32>
    %cst_46 = arith.constant -2.50521079E-8 : f32
    %106 = vector.broadcast %cst_46 : f32 to vector<32x128xf32>
    %107 = arith.mulf %106, %105 : vector<32x128xf32>
    %cst_47 = arith.constant 2.75573188E-6 : f32
    %108 = vector.broadcast %cst_47 : f32 to vector<32x128xf32>
    %109 = arith.addf %107, %108 : vector<32x128xf32>
    %110 = arith.mulf %109, %105 : vector<32x128xf32>
    %cst_48 = arith.constant -1.98412701E-4 : f32
    %111 = vector.broadcast %cst_48 : f32 to vector<32x128xf32>
    %112 = arith.addf %110, %111 : vector<32x128xf32>
    %113 = arith.mulf %112, %105 : vector<32x128xf32>
    %cst_49 = arith.constant 0.00833333377 : f32
    %114 = vector.broadcast %cst_49 : f32 to vector<32x128xf32>
    %115 = arith.addf %113, %114 : vector<32x128xf32>
    %116 = arith.mulf %115, %105 : vector<32x128xf32>
    %cst_50 = arith.constant -0.166666672 : f32
    %117 = vector.broadcast %cst_50 : f32 to vector<32x128xf32>
    %118 = arith.addf %116, %117 : vector<32x128xf32>
    %119 = arith.mulf %104, %105 : vector<32x128xf32>
    %120 = arith.mulf %119, %118 : vector<32x128xf32>
    %121 = arith.addf %104, %120 : vector<32x128xf32>
    %122 = arith.fptosi %98 : vector<32x128xf32> to vector<32x128xi32>
    %c1_i32_51 = arith.constant 1 : i32
    %123 = vector.broadcast %c1_i32_51 : i32 to vector<32x128xi32>
    %124 = arith.andi %122, %123 : vector<32x128xi32>
    %c1_i32_52 = arith.constant 1 : i32
    %125 = vector.broadcast %c1_i32_52 : i32 to vector<32x128xi32>
    %126 = arith.cmpi eq, %124, %125 : vector<32x128xi32>
    %cst_53 = arith.constant 0.000000e+00 : f32
    %127 = vector.broadcast %cst_53 : f32 to vector<32x128xf32>
    %128 = arith.subf %127, %121 : vector<32x128xf32>
    %129 = arith.select %126, %128, %121 : vector<32x128xi1>, vector<32x128xf32>
    %c0_54 = arith.constant 0 : index
    %c0_55 = arith.constant 0 : index
    %130 = vector.load %arg4[%c0_54, %c0_55] : memref<128x32xf32, #tpu.memory_space<vmem>>, vector<128x32xf32>
    %cst_56 = arith.constant dense<0.000000e+00> : vector<32x32xf32>
    %131 = tpu.matmul %129, %130, %cst_56 {dimension_numbers = #tpu.dot_dimension_numbers<[1], [0], [0], [1], [0, 0, 1, 1], [], []>} : vector<32x128xf32>, vector<128x32xf32>, vector<32x32xf32> -> vector<32x32xf32>
    %c0_57 = arith.constant 0 : index
    %c0_58 = arith.constant 0 : index
    %132 = vector.load %arg5[%c0_57, %c0_58] : memref<1x32xf32, #tpu.memory_space<vmem>>, vector<1x32xf32>
    %133 = vector.broadcast %132 : vector<1x32xf32> to vector<32x32xf32>
    %134 = arith.addf %131, %133 : vector<32x32xf32>
    %c0_59 = arith.constant 0 : index
    %c0_60 = arith.constant 0 : index
    %135 = vector.load %arg6[%c0_59, %c0_60] : memref<32x32xf32, #tpu.memory_space<vmem>>, vector<32x32xf32>
    tpu.vector_store %arg6[%c0_59, %c0_60], %134 {strides = array<i32>} : memref<32x32xf32, #tpu.memory_space<vmem>>, vector<32x32xf32>,
    return
  }
  func.func @transform_0(%arg0: i32) -> (i32, i32) {
    %c0_i32 = arith.constant 0 : i32
    %c0_i32_0 = arith.constant 0 : i32
    return %arg0, %c0_i32 : i32, i32
  }
  func.func @transform_1(%arg0: i32) -> (i32, i32, i32) {
    %c0_i32 = arith.constant 0 : i32
    %c0_i32_0 = arith.constant 0 : i32
    %c0_i32_1 = arith.constant 0 : i32
    %c0_i32_2 = arith.constant 0 : i32
    return %c0_i32, %c0_i32_0, %c0_i32_1 : i32, i32, i32
  }
  func.func @transform_2(%arg0: i32) -> (i32, i32, i32) {
    %c0_i32 = arith.constant 0 : i32
    %c0_i32_0 = arith.constant 0 : i32
    %c0_i32_1 = arith.constant 0 : i32
    %c0_i32_2 = arith.constant 0 : i32
    return %c0_i32, %c0_i32_0, %c0_i32_1 : i32, i32, i32
  }
  func.func @transform_3(%arg0: i32) -> (i32, i32) {
    %c0_i32 = arith.constant 0 : i32
    %c0_i32_0 = arith.constant 0 : i32
    %c0_i32_1 = arith.constant 0 : i32
    return %c0_i32, %c0_i32_0 : i32, i32
  }
  func.func @transform_4(%arg0: i32) -> (i32, i32) {
    %c0_i32 = arith.constant 0 : i32
    %c0_i32_0 = arith.constant 0 : i32
    %c0_i32_1 = arith.constant 0 : i32
    return %c0_i32, %c0_i32_0 : i32, i32
  }
  func.func @transform_5(%arg0: i32) -> (i32, i32) {
    %c0_i32 = arith.constant 0 : i32
    %c0_i32_0 = arith.constant 0 : i32
    return %arg0, %c0_i32 : i32, i32
  }
}

</mosaic_0001>

<llo_original>
// kernel: siren_forward.1
$region0: #{siren_forward.1}
  #allocation0 [shape = 'u32[]', space=smem, size = 0x4, offset = 0x4, fixed_abs, tag = 'smem constant byte address 0x4 - core index']
  #allocation1 [shape = 'u32[72,128]{1,0:T(1,128)}', space=vmem, size = 0x9000, scoped, tag = 'internal scratch']
  %s0 = inlined_call_operand.vmem [shape: f32[64,128], index: 0, kind: input, shape index: {}]
  %s1 = inlined_call_operand.vmem [shape: f32[3,128,128], index: 1, kind: input, shape index: {}]
  %s2 = inlined_call_operand.vmem [shape: f32[3,1,128], index: 2, kind: input, shape index: {}]
  %s3 = inlined_call_operand.vmem [shape: f32[128,32], index: 3, kind: input, shape index: {}]
  %s4 = inlined_call_operand.vmem [shape: f32[1,32], index: 4, kind: input, shape index: {}]
  %s5 = inlined_call_operand.vmem [shape: f32[64,32], index: 5, kind: output, shape index: {}]
  %s6 = sld [smem:[#allocation0]]
  $region53: #{siren_forward.1} parent=0
    _
  %s8 = ssub.s32 1, %s6
  %s9 = scalar_select 0, %s8, %s6
  loop: start=0, step=1, limit=4
  $region2: #{siren_forward.1} parent=0 // loop_pre_header
    _
  $region3: #{siren_forward.1} parent=0 // loop_header
    %s11 = sphi 0, %s15
    %p12 = scmp.ge.s32.totalorder %s11, 4
    %s21 = sphi 0, %s23
    %s24 = sphi 0, %s21
    %s25 = sphi 0, %s24
    %s41 = sphi 0, %s25
    %s45 = sphi 0, %s45
    %s47 = sphi 0, %s45
    %s48 = sphi 0, %s47
    %s62 = sphi 0, %s48
    %s66 = sphi 0, %s66
    %s68 = sphi 0, %s66
    %s69 = sphi 0, %s68
    %s83 = sphi 0, %s69
    %s87 = sphi 0, %s87
    %s89 = sphi 0, %s87
    %s90 = sphi 0, %s89
    %s104 = sphi 0, %s90
    %s108 = sphi 0, %s108
    %s110 = sphi 0, %s108
    %s111 = sphi 0, %s110
    %s125 = sphi 0, %s111
    %s131 = sphi 0, %s133
    %s134 = sphi 0, %s131
    %s135 = sphi 0, %s134
    %s151 = sphi 0, %s135
  $region4: #{siren_forward.1} parent=0 // loop_header_branch
    %14 = sbr.rel (%p12) target = $region8
  $region5: #{siren_forward.1} parent=0 // loop_body
    %s16 = ssub.s32 %s11, 1
    %s17 = ssub.s32 %s11, 2
    %s18 = sadd.s32 %s11, 1
    %s19 = ssub.s32 %s11, %s18
    %p20 = scmp.eq.s32.totalorder %s19, 0
    %s22 = sadd.s32 %s21, 1
    %s23 = scalar_select %p20, %s21, %s22
    %p26 = pneg %p20
    %p27 = scmp.eq.s32.totalorder %s11, 1
    %p28 = por %p26, %p27
    %p29 = scmp.ne.s32.totalorder %s21, %s24
    %p30 = scmp.eq.s32.totalorder %s11, 0
    %p31 = por %p29, %p30
    %p32 = scmp.ne.s32.totalorder %s21, %s24
    %p33 = scmp.eq.s32.totalorder %s16, 1
    %p34 = por %p32, %p33
    %p35 = scmp.ne.s32.totalorder %s24, %s25
    %p36 = scmp.eq.s32.totalorder %s16, 0
    %p37 = por %p35, %p36
    %p38 = scmp.ne.s32.totalorder %s24, %s25
    %p39 = scmp.eq.s32.totalorder %s17, 1
    %p40 = por %p38, %p39
    %p42 = scmp.ne.s32.totalorder %s25, %s41
    %p43 = scmp.eq.s32.totalorder %s17, 0
    %p44 = por %p42, %p43
    %s46 = sadd.s32 %s45, 1
    %p49 = scmp.eq.s32.totalorder %s11, 1
    %p50 = scmp.ne.s32.totalorder %s45, %s47
    %p51 = scmp.eq.s32.totalorder %s11, 0
    %p52 = por %p50, %p51
    %p53 = scmp.ne.s32.totalorder %s45, %s47
    %p54 = scmp.eq.s32.totalorder %s16, 1
    %p55 = por %p53, %p54
    %p56 = scmp.ne.s32.totalorder %s47, %s48
    %p57 = scmp.eq.s32.totalorder %s16, 0
    %p58 = por %p56, %p57
    %p59 = scmp.ne.s32.totalorder %s47, %s48
    %p60 = scmp.eq.s32.totalorder %s17, 1
    %p61 = por %p59, %p60
    %p63 = scmp.ne.s32.totalorder %s48, %s62
    %p64 = scmp.eq.s32.totalorder %s17, 0
    %p65 = por %p63, %p64
    %s67 = sadd.s32 %s66, 1
    %p70 = scmp.eq.s32.totalorder %s11, 1
    %p71 = scmp.ne.s32.totalorder %s66, %s68
    %p72 = scmp.eq.s32.totalorder %s11, 0
    %p73 = por %p71, %p72
    %p74 = scmp.ne.s32.totalorder %s66, %s68
    %p75 = scmp.eq.s32.totalorder %s16, 1
    %p76 = por %p74, %p75
    %p77 = scmp.ne.s32.totalorder %s68, %s69
    %p78 = scmp.eq.s32.totalorder %s16, 0
    %p79 = por %p77, %p78
    %p80 = scmp.ne.s32.totalorder %s68, %s69
    %p81 = scmp.eq.s32.totalorder %s17, 1
    %p82 = por %p80, %p81
    %p84 = scmp.ne.s32.totalorder %s69, %s83
    %p85 = scmp.eq.s32.totalorder %s17, 0
    %p86 = por %p84, %p85
    %s88 = sadd.s32 %s87, 1
    %p91 = scmp.eq.s32.totalorder %s11, 1
    %p92 = scmp.ne.s32.totalorder %s87, %s89
    %p93 = scmp.eq.s32.totalorder %s11, 0
    %p94 = por %p92, %p93
    %p95 = scmp.ne.s32.totalorder %s87, %s89
    %p96 = scmp.eq.s32.totalorder %s16, 1
    %p97 = por %p95, %p96
    %p98 = scmp.ne.s32.totalorder %s89, %s90
    %p99 = scmp.eq.s32.totalorder %s16, 0
    %p100 = por %p98, %p99
    %p101 = scmp.ne.s32.totalorder %s89, %s90
    %p102 = scmp.eq.s32.totalorder %s17, 1
    %p103 = por %p101, %p102
    %p105 = scmp.ne.s32.totalorder %s90, %s104
    %p106 = scmp.eq.s32.totalorder %s17, 0
    %p107 = por %p105, %p106
    %s109 = sadd.s32 %s108, 1
    %p112 = scmp.eq.s32.totalorder %s11, 1
    %p113 = scmp.ne.s32.totalorder %s108, %s110
    %p114 = scmp.eq.s32.totalorder %s11, 0
    %p115 = por %p113, %p114
    %p116 = scmp.ne.s32.totalorder %s108, %s110
    %p117 = scmp.eq.s32.totalorder %s16, 1
    %p118 = por %p116, %p117
    %p119 = scmp.ne.s32.totalorder %s110, %s111
    %p120 = scmp.eq.s32.totalorder %s16, 0
    %p121 = por %p119, %p120
    %p122 = scmp.ne.s32.totalorder %s110, %s111
    %p123 = scmp.eq.s32.totalorder %s17, 1
    %p124 = por %p122, %p123
    %p126 = scmp.ne.s32.totalorder %s111, %s125
    %p127 = scmp.eq.s32.totalorder %s17, 0
    %p128 = por %p126, %p127
    %s129 = ssub.s32 %s11, %s18
    %p130 = scmp.eq.s32.totalorder %s129, 0
    %s132 = sadd.s32 %s131, 1
    %s133 = scalar_select %p130, %s131, %s132
    %p136 = pneg %p130
    %p137 = scmp.eq.s32.totalorder %s11, 1
    %p138 = por %p136, %p137
    %p139 = scmp.ne.s32.totalorder %s131, %s134
    %p140 = scmp.eq.s32.totalorder %s11, 0
    %p141 = por %p139, %p140
    %p142 = scmp.ne.s32.totalorder %s131, %s134
    %p143 = scmp.eq.s32.totalorder %s16, 1
    %p144 = por %p142, %p143
    %p145 = scmp.ne.s32.totalorder %s134, %s135
    %p146 = scmp.eq.s32.totalorder %s16, 0
    %p147 = por %p145, %p146
    %p148 = scmp.ne.s32.totalorder %s134, %s135
    %p149 = scmp.eq.s32.totalorder %s17, 1
    %p150 = por %p148, %p149
    %p152 = scmp.ne.s32.totalorder %s135, %s151
    %p153 = scmp.eq.s32.totalorder %s17, 0
    %p154 = por %p152, %p153
    %p155 = scmp.le.s32.totalorder 1, %s11
    %p156 = scmp.lt.s32.totalorder %s11, 3
    %p157 = pnand %p155, %p156
    %p158 = pneg %p157
    // Predicated region
    $region9: #{siren_forward.1} parent=5 // pred_check
      _
    $region10: #{siren_forward.1} parent=5 // pred_check_branch
      %160 = sbr.rel (%p157) target = $region12
    $region11: #{siren_forward.1} parent=5 // pred_region
      %s161 = ssub.s32 %s11, 1
      // Predicated region
      $region13: #{siren_forward.1} parent=11 // pred_check
        %p162 = pneg %p58
      $region14: #{siren_forward.1} parent=11 // pred_check_branch
        %164 = sbr.rel (%p162) target = $region16
      $region15: #{siren_forward.1} parent=11 // pred_region
        _
      $region16: #{siren_forward.1} parent=11 // pred_fallthru
        _
      // Predicated region
      $region17: #{siren_forward.1} parent=11 // pred_check
        %p165 = pneg %p79
      $region18: #{siren_forward.1} parent=11 // pred_check_branch
        %167 = sbr.rel (%p165) target = $region20
      $region19: #{siren_forward.1} parent=11 // pred_region
        _
      $region20: #{siren_forward.1} parent=11 // pred_fallthru
        _
      // Predicated region
      $region21: #{siren_forward.1} parent=11 // pred_check
        %p168 = pneg %p100
      $region22: #{siren_forward.1} parent=11 // pred_check_branch
        %170 = sbr.rel (%p168) target = $region24
      $region23: #{siren_forward.1} parent=11 // pred_region
        _
      $region24: #{siren_forward.1} parent=11 // pred_fallthru
        _
      // Predicated region
      $region25: #{siren_forward.1} parent=11 // pred_check
        %p171 = pneg %p121
      $region26: #{siren_forward.1} parent=11 // pred_check_branch
        %173 = sbr.rel (%p171) target = $region28
      $region27: #{siren_forward.1} parent=11 // pred_region
        _
      $region28: #{siren_forward.1} parent=11 // pred_fallthru
        _
    $region12: #{siren_forward.1} parent=5 // pred_fallthru
      _
    %p174 = scmp.lt.s32.totalorder %s11, 2
    // Predicated region
    $region29: #{siren_forward.1} parent=5 // pred_check
      %p175 = pneg %p174
    $region30: #{siren_forward.1} parent=5 // pred_check_branch
      %177 = sbr.rel (%p175) target = $region32
    $region31: #{siren_forward.1} parent=5 // pred_region
      // Predicated region
      $region33: #{siren_forward.1} parent=31 // pred_check
        %p178 = pneg %p31
      $region34: #{siren_forward.1} parent=31 // pred_check_branch
        %180 = sbr.rel (%p178) target = $region36
      $region35: #{siren_forward.1} parent=31 // pred_region
        %s181 = smul.u32 4, %s11
        %p182 = scmp.lt.s32.totalorder %s181, 7
        %s183 = scalar_select %p182, %s181, 7
        %s184 = smul.addr %s183, 8
        %s185 = scalar_lea.vmem %s0, %s184
        %s186 = smul.u32 4, %s11
      $region36: #{siren_forward.1} parent=31 // pred_fallthru
        _
    $region32: #{siren_forward.1} parent=5 // pred_fallthru
      _
    %p187 = scmp.le.s32.totalorder 1, %s11
    %p188 = scmp.lt.s32.totalorder %s11, 3
    %p189 = pnand %p187, %p188
    %p190 = pneg %p189
    // Predicated region
    $region37: #{siren_forward.1} parent=5 // pred_check
      _
    $region38: #{siren_forward.1} parent=5 // pred_check_branch
      %192 = sbr.rel (%p189) target = $region40
    $region39: #{siren_forward.1} parent=5 // pred_region
      %s193 = ssub.s32 %s11, 1
      %s194 = smul.u32 4, %s16
      %p195 = scmp.lt.s32.totalorder %s194, 7
      %s196 = scalar_select %p195, %s194, 7
      %s197 = smul.addr %s196, 8
      %s198 = scalar_lea.vmem %s0, %s197
      %p199 = pneg %p37
      %p200 = pneg %p34
      %p201 = pneg %p58
      %p202 = pneg %p55
      %p203 = pneg %p79
      %p204 = pneg %p76
      %p205 = pneg %p100
      %p206 = pneg %p97
      %p207 = pneg %p121
      %p208 = pneg %p118
      %p209 = pneg %p147
      %p210 = pneg %p144
      %s211 = smul.u32 4, %s16
      %p212 = scmp.lt.s32.totalorder %s211, 7
      %s213 = scalar_select %p212, %s211, 7
      %s214 = smul.addr %s213, 8
      %s215 = scalar_lea.vmem %s5, %s214
      %s216 = smul.u32 4, %s16
      %p217 = scmp.lt.s32.totalorder %s216, 7
      %s218 = scalar_select %p217, %s216, 7
      %s219 = smul.addr %s218, 8
      %s220 = scalar_lea.vmem %s0, %s219
      %s221 = smul.u32 4, %s16
      %s222 = smul.u32 4, %s16
      %p223 = scmp.lt.s32.totalorder %s222, 7
      %s224 = scalar_select %p223, %s222, 7
      %s225 = smul.addr %s224, 8
      %s226 = scalar_lea.vmem %s5, %s225
      %s227 = smul.u32 4, %s16
      %v228 = vld [vmem:[%s220] sm:$0xff]
      %v229 = vld [vmem:[%s220 + $0x8] sm:$0xff]
      %v230 = vld [vmem:[%s220 + $0x10] sm:$0xff]
      %v231 = vld [vmem:[%s220 + $0x18] sm:$0xff]
      %v232 = vld [vmem:[%s1] sm:$0xff]
      %v233 = vld [vmem:[%s1 + $0x8] sm:$0xff]
      %v234 = vld [vmem:[%s1 + $0x10] sm:$0xff]
      %v235 = vld [vmem:[%s1 + $0x18] sm:$0xff]
      %v236 = vld [vmem:[%s1 + $0x20] sm:$0xff]
      %v237 = vld [vmem:[%s1 + $0x28] sm:$0xff]
      %v238 = vld [vmem:[%s1 + $0x30] sm:$0xff]
      %v239 = vld [vmem:[%s1 + $0x38] sm:$0xff]
      %v240 = vld [vmem:[%s1 + $0x40] sm:$0xff]
      %v241 = vld [vmem:[%s1 + $0x48] sm:$0xff]
      %v242 = vld [vmem:[%s1 + $0x50] sm:$0xff]
      %v243 = vld [vmem:[%s1 + $0x58] sm:$0xff]
      %v244 = vld [vmem:[%s1 + $0x60] sm:$0xff]
      %v245 = vld [vmem:[%s1 + $0x68] sm:$0xff]
      %v246 = vld [vmem:[%s1 + $0x70] sm:$0xff]
      %v247 = vld [vmem:[%s1 + $0x78] sm:$0xff]
      %v248 = vld [vmem:[%s2] sm:$0x1]
      %v250 = vperm.slane %v248, 0
      %252 = vmatpush.msra.mxu0 %v247
      %253 = vmatpush.msra.mxu0 %v246
      %254 = vmatpush.msra.mxu0 %v245
      %255 = vmatpush.msra.mxu0 %v244
      %256 = vmatpush.msra.mxu0 %v243
      %257 = vmatpush.msra.mxu0 %v242
      %258 = vmatpush.msra.mxu0 %v241
      %259 = vmatpush.msra.mxu0 %v240
      %260 = vmatpush.msra.mxu0 %v239
      %261 = vmatpush.msra.mxu0 %v238
      %262 = vmatpush.msra.mxu0 %v237
      %263 = vmatpush.msra.mxu0 %v236
      %264 = vmatpush.msra.mxu0 %v235
      %265 = vmatpush.msra.mxu0 %v234
      %266 = vmatpush.msra.mxu0 %v233
      %267 = vmatpush.msra.mxu0 %v232
      %268 = vmatmul.f32.gmra.mxu0 %v228
      %v269 = vpop.f32.mrf.mxu0
      %v270 = vadd.f32 %v250, %v269
      %271 = vmatmul.f32.gmra.mxu0 %v229
      %v272 = vpop.f32.mrf.mxu0
      %v273 = vadd.f32 %v250, %v272
      %274 = vmatmul.f32.gmra.mxu0 %v230
      %v275 = vpop.f32.mrf.mxu0
      %v276 = vadd.f32 %v250, %v275
      %277 = vmatmul.f32.gmra.mxu0 %v231
      %v278 = vpop.f32.mrf.mxu0
      %v279 = vadd.f32 %v250, %v278
      %280 = vdwg.mxu0
      %v281 = vmul.f32 %v270, 0.31830987
      %v282 = vmul.f32 %v273, 0.31830987
      %v283 = vmul.f32 %v276, 0.31830987
      %v284 = vmul.f32 %v279, 0.31830987
      %v285 = vadd.f32 %v281, 0.5
      %v286 = vadd.f32 %v282, 0.5
      %v287 = vadd.f32 %v283, 0.5
      %v288 = vadd.f32 %v284, 0.5
      %v289 = vfloor.f32 %v285
      %v290 = vfloor.f32 %v286
      %v291 = vfloor.f32 %v287
      %v292 = vfloor.f32 %v288
      %v293 = vmul.f32 %v289, 3.140625
      %v294 = vmul.f32 %v290, 3.140625
      %v295 = vmul.f32 %v291, 3.140625
      %v296 = vmul.f32 %v292, 3.140625
      %v297 = vsub.f32 %v270, %v293
      %v298 = vsub.f32 %v273, %v294
      %v299 = vsub.f32 %v276, %v295
      %v300 = vsub.f32 %v279, %v296
      %v301 = vmul.f32 %v289, 0.0009676536
      %v302 = vmul.f32 %v290, 0.0009676536
      %v303 = vmul.f32 %v291, 0.0009676536
      %v304 = vmul.f32 %v292, 0.0009676536
      %v305 = vsub.f32 %v297, %v301
      %v306 = vsub.f32 %v298, %v302
      %v307 = vsub.f32 %v299, %v303
      %v308 = vsub.f32 %v300, %v304
      %v309 = vmul.f32 %v305, %v305
      %v310 = vmul.f32 %v306, %v306
      %v311 = vmul.f32 %v307, %v307
      %v312 = vmul.f32 %v308, %v308
      %v313 = vmul.f32 %v309, -2.5052108e-08
      %v314 = vmul.f32 %v310, -2.5052108e-08
      %v315 = vmul.f32 %v311, -2.5052108e-08
      %v316 = vmul.f32 %v312, -2.5052108e-08
      %v317 = vadd.f32 %v313, 2.7557319e-06
      %v318 = vadd.f32 %v314, 2.7557319e-06
      %v319 = vadd.f32 %v315, 2.7557319e-06
      %v320 = vadd.f32 %v316, 2.7557319e-06
      %v321 = vmul.f32 %v317, %v309
      %v322 = vmul.f32 %v318, %v310
      %v323 = vmul.f32 %v319, %v311
      %v324 = vmul.f32 %v320, %v312
      %v325 = vadd.f32 %v321, -0.0001984127
      %v326 = vadd.f32 %v322, -0.0001984127
      %v327 = vadd.f32 %v323, -0.0001984127
      %v328 = vadd.f32 %v324, -0.0001984127
      %v329 = vmul.f32 %v325, %v309
      %v330 = vmul.f32 %v326, %v310
      %v331 = vmul.f32 %v327, %v311
      %v332 = vmul.f32 %v328, %v312
      %v333 = vadd.f32 %v329, 0.008333334
      %v334 = vadd.f32 %v330, 0.008333334
      %v335 = vadd.f32 %v331, 0.008333334
      %v336 = vadd.f32 %v332, 0.008333334
      %v337 = vmul.f32 %v333, %v309
      %v338 = vmul.f32 %v334, %v310
      %v339 = vmul.f32 %v335, %v311
      %v340 = vmul.f32 %v336, %v312
      %v341 = vadd.f32 %v337, -0.16666667
      %v342 = vadd.f32 %v338, -0.16666667
      %v343 = vadd.f32 %v339, -0.16666667
      %v344 = vadd.f32 %v340, -0.16666667
      %v345 = vmul.f32 %v305, %v309
      %v346 = vmul.f32 %v306, %v310
      %v347 = vmul.f32 %v307, %v311
      %v348 = vmul.f32 %v308, %v312
      %v349 = vmul.f32 %v345, %v341
      %v350 = vmul.f32 %v346, %v342
      %v351 = vmul.f32 %v347, %v343
      %v352 = vmul.f32 %v348, %v344
      %v353 = vadd.f32 %v305, %v349
      %v354 = vadd.f32 %v306, %v350
      %v355 = vadd.f32 %v307, %v351
      %v356 = vadd.f32 %v308, %v352
      %v357 = vcvt.f32.s32.to.zero.pseudo %v289
      %v358 = vcvt.f32.s32.to.zero.pseudo %v290
      %v359 = vcvt.f32.s32.to.zero.pseudo %v291
      %v360 = vcvt.f32.s32.to.zero.pseudo %v292
      %v361 = vand.u32 %v357, 1
      %v362 = vand.u32 %v358, 1
      %v363 = vand.u32 %v359, 1
      %v364 = vand.u32 %v360, 1
      %vm365 = vcmp.eq.s32.totalorder %v361, 1
      %vm366 = vcmp.eq.s32.totalorder %v362, 1
      %vm367 = vcmp.eq.s32.totalorder %v363, 1
      %vm368 = vcmp.eq.s32.totalorder %v364, 1
      %v369 = vsub.f32 0.0, %v353
      %v370 = vsub.f32 0.0, %v354
      %v371 = vsub.f32 0.0, %v355
      %v372 = vsub.f32 0.0, %v356
      %v373 = vsel %vm365, %v369, %v353
      %v374 = vsel %vm366, %v370, %v354
      %v375 = vsel %vm367, %v371, %v355
      %v376 = vsel %vm368, %v372, %v356
      %s377 = scalar_lea.vmem %s1, 128
      %v378 = vld [vmem:[%s377] sm:$0xff]
      %v379 = vld [vmem:[%s377 + $0x8] sm:$0xff]
      %v380 = vld [vmem:[%s377 + $0x10] sm:$0xff]
      %v381 = vld [vmem:[%s377 + $0x18] sm:$0xff]
      %v382 = vld [vmem:[%s377 + $0x20] sm:$0xff]
      %v383 = vld [vmem:[%s377 + $0x28] sm:$0xff]
      %v384 = vld [vmem:[%s377 + $0x30] sm:$0xff]
      %v385 = vld [vmem:[%s377 + $0x38] sm:$0xff]
      %v386 = vld [vmem:[%s377 + $0x40] sm:$0xff]
      %v387 = vld [vmem:[%s377 + $0x48] sm:$0xff]
      %v388 = vld [vmem:[%s377 + $0x50] sm:$0xff]
      %v389 = vld [vmem:[%s377 + $0x58] sm:$0xff]
      %v390 = vld [vmem:[%s377 + $0x60] sm:$0xff]
      %v391 = vld [vmem:[%s377 + $0x68] sm:$0xff]
      %v392 = vld [vmem:[%s377 + $0x70] sm:$0xff]
      %v393 = vld [vmem:[%s377 + $0x78] sm:$0xff]
      %s394 = scalar_lea.vmem %s2, 1
      %v395 = vld [vmem:[%s394] sm:$0x1]
      %v397 = vperm.slane %v395, 0
      %399 = vmatpush.msra.mxu0 %v393
      %400 = vmatpush.msra.mxu0 %v392
      %401 = vmatpush.msra.mxu0 %v391
      %402 = vmatpush.msra.mxu0 %v390
      %403 = vmatpush.msra.mxu0 %v389
      %404 = vmatpush.msra.mxu0 %v388
      %405 = vmatpush.msra.mxu0 %v387
      %406 = vmatpush.msra.mxu0 %v386
      %407 = vmatpush.msra.mxu0 %v385
      %408 = vmatpush.msra.mxu0 %v384
      %409 = vmatpush.msra.mxu0 %v383
      %410 = vmatpush.msra.mxu0 %v382
      %411 = vmatpush.msra.mxu0 %v381
      %412 = vmatpush.msra.mxu0 %v380
      %413 = vmatpush.msra.mxu0 %v379
      %414 = vmatpush.msra.mxu0 %v378
      %415 = vmatmul.f32.gmra.mxu0 %v373
      %v416 = vpop.f32.mrf.mxu0
      %v417 = vadd.f32 %v397, %v416
      %418 = vmatmul.f32.gmra.mxu0 %v374
      %v419 = vpop.f32.mrf.mxu0
      %v420 = vadd.f32 %v397, %v419
      %421 = vmatmul.f32.gmra.mxu0 %v375
      %v422 = vpop.f32.mrf.mxu0
      %v423 = vadd.f32 %v397, %v422
      %424 = vmatmul.f32.gmra.mxu0 %v376
      %v425 = vpop.f32.mrf.mxu0
      %v426 = vadd.f32 %v397, %v425
      %427 = vdwg.mxu0
      %v428 = vmul.f32 %v417, 0.31830987
      %v429 = vmul.f32 %v420, 0.31830987
      %v430 = vmul.f32 %v423, 0.31830987
      %v431 = vmul.f32 %v426, 0.31830987
      %v432 = vadd.f32 %v428, 0.5
      %v433 = vadd.f32 %v429, 0.5
      %v434 = vadd.f32 %v430, 0.5
      %v435 = vadd.f32 %v431, 0.5
      %v436 = vfloor.f32 %v432
      %v437 = vfloor.f32 %v433
      %v438 = vfloor.f32 %v434
      %v439 = vfloor.f32 %v435
      %v440 = vmul.f32 %v436, 3.140625
      %v441 = vmul.f32 %v437, 3.140625
      %v442 = vmul.f32 %v438, 3.140625
      %v443 = vmul.f32 %v439, 3.140625
      %v444 = vsub.f32 %v417, %v440
      %v445 = vsub.f32 %v420, %v441
      %v446 = vsub.f32 %v423, %v442
      %v447 = vsub.f32 %v426, %v443
      %v448 = vmul.f32 %v436, 0.0009676536
      %v449 = vmul.f32 %v437, 0.0009676536
      %v450 = vmul.f32 %v438, 0.0009676536
      %v451 = vmul.f32 %v439, 0.0009676536
      %v452 = vsub.f32 %v444, %v448
      %v453 = vsub.f32 %v445, %v449
      %v454 = vsub.f32 %v446, %v450
      %v455 = vsub.f32 %v447, %v451
      %v456 = vmul.f32 %v452, %v452
      %v457 = vmul.f32 %v453, %v453
      %v458 = vmul.f32 %v454, %v454
      %v459 = vmul.f32 %v455, %v455
      %v460 = vmul.f32 %v456, -2.5052108e-08
      %v461 = vmul.f32 %v457, -2.5052108e-08
      %v462 = vmul.f32 %v458, -2.5052108e-08
      %v463 = vmul.f32 %v459, -2.5052108e-08
      %v464 = vadd.f32 %v460, 2.7557319e-06
      %v465 = vadd.f32 %v461, 2.7557319e-06
      %v466 = vadd.f32 %v462, 2.7557319e-06
      %v467 = vadd.f32 %v463, 2.7557319e-06
      %v468 = vmul.f32 %v464, %v456
      %v469 = vmul.f32 %v465, %v457
      %v470 = vmul.f32 %v466, %v458
      %v471 = vmul.f32 %v467, %v459
      %v472 = vadd.f32 %v468, -0.0001984127
      %v473 = vadd.f32 %v469, -0.0001984127
      %v474 = vadd.f32 %v470, -0.0001984127
      %v475 = vadd.f32 %v471, -0.0001984127
      %v476 = vmul.f32 %v472, %v456
      %v477 = vmul.f32 %v473, %v457
      %v478 = vmul.f32 %v474, %v458
      %v479 = vmul.f32 %v475, %v459
      %v480 = vadd.f32 %v476, 0.008333334
      %v481 = vadd.f32 %v477, 0.008333334
      %v482 = vadd.f32 %v478, 0.008333334
      %v483 = vadd.f32 %v479, 0.008333334
      %v484 = vmul.f32 %v480, %v456
      %v485 = vmul.f32 %v481, %v457
      %v486 = vmul.f32 %v482, %v458
      %v487 = vmul.f32 %v483, %v459
      %v488 = vadd.f32 %v484, -0.16666667
      %v489 = vadd.f32 %v485, -0.16666667
      %v490 = vadd.f32 %v486, -0.16666667
      %v491 = vadd.f32 %v487, -0.16666667
      %v492 = vmul.f32 %v452, %v456
      %v493 = vmul.f32 %v453, %v457
      %v494 = vmul.f32 %v454, %v458
      %v495 = vmul.f32 %v455, %v459
      %v496 = vmul.f32 %v492, %v488
      %v497 = vmul.f32 %v493, %v489
      %v498 = vmul.f32 %v494, %v490
      %v499 = vmul.f32 %v495, %v491
      %v500 = vadd.f32 %v452, %v496
      %v501 = vadd.f32 %v453, %v497
      %v502 = vadd.f32 %v454, %v498
      %v503 = vadd.f32 %v455, %v499
      %v504 = vcvt.f32.s32.to.zero.pseudo %v436
      %v505 = vcvt.f32.s32.to.zero.pseudo %v437
      %v506 = vcvt.f32.s32.to.zero.pseudo %v438
      %v507 = vcvt.f32.s32.to.zero.pseudo %v439
      %v508 = vand.u32 %v504, 1
      %v509 = vand.u32 %v505, 1
      %v510 = vand.u32 %v506, 1
      %v511 = vand.u32 %v507, 1
      %vm512 = vcmp.eq.s32.totalorder %v508, 1
      %vm513 = vcmp.eq.s32.totalorder %v509, 1
      %vm514 = vcmp.eq.s32.totalorder %v510, 1
      %vm515 = vcmp.eq.s32.totalorder %v511, 1
      %v516 = vsub.f32 0.0, %v500
      %v517 = vsub.f32 0.0, %v501
      %v518 = vsub.f32 0.0, %v502
      %v519 = vsub.f32 0.0, %v503
      %v520 = vsel %vm512, %v516, %v500
      %v521 = vsel %vm513, %v517, %v501
      %v522 = vsel %vm514, %v518, %v502
      %v523 = vsel %vm515, %v519, %v503
      %s524 = scalar_lea.vmem %s1, 256
      %v525 = vld [vmem:[%s524] sm:$0xff]
      %v526 = vld [vmem:[%s524 + $0x8] sm:$0xff]
      %v527 = vld [vmem:[%s524 + $0x10] sm:$0xff]
      %v528 = vld [vmem:[%s524 + $0x18] sm:$0xff]
      %v529 = vld [vmem:[%s524 + $0x20] sm:$0xff]
      %v530 = vld [vmem:[%s524 + $0x28] sm:$0xff]
      %v531 = vld [vmem:[%s524 + $0x30] sm:$0xff]
      %v532 = vld [vmem:[%s524 + $0x38] sm:$0xff]
      %v533 = vld [vmem:[%s524 + $0x40] sm:$0xff]
      %v534 = vld [vmem:[%s524 + $0x48] sm:$0xff]
      %v535 = vld [vmem:[%s524 + $0x50] sm:$0xff]
      %v536 = vld [vmem:[%s524 + $0x58] sm:$0xff]
      %v537 = vld [vmem:[%s524 + $0x60] sm:$0xff]
      %v538 = vld [vmem:[%s524 + $0x68] sm:$0xff]
      %v539 = vld [vmem:[%s524 + $0x70] sm:$0xff]
      %v540 = vld [vmem:[%s524 + $0x78] sm:$0xff]
      %s541 = scalar_lea.vmem %s2, 2
      %v542 = vld [vmem:[%s541] sm:$0x1]
      %v544 = vperm.slane %v542, 0
      %546 = vmatpush.msra.mxu0 %v540
      %547 = vmatpush.msra.mxu0 %v539
      %548 = vmatpush.msra.mxu0 %v538
      %549 = vmatpush.msra.mxu0 %v537
      %550 = vmatpush.msra.mxu0 %v536
      %551 = vmatpush.msra.mxu0 %v535
      %552 = vmatpush.msra.mxu0 %v534
      %553 = vmatpush.msra.mxu0 %v533
      %554 = vmatpush.msra.mxu0 %v532
      %555 = vmatpush.msra.mxu0 %v531
      %556 = vmatpush.msra.mxu0 %v530
      %557 = vmatpush.msra.mxu0 %v529
      %558 = vmatpush.msra.mxu0 %v528
      %559 = vmatpush.msra.mxu0 %v527
      %560 = vmatpush.msra.mxu0 %v526
      %561 = vmatpush.msra.mxu0 %v525
      %562 = vmatmul.f32.gmra.mxu0 %v520
      %v563 = vpop.f32.mrf.mxu0
      %v564 = vadd.f32 %v544, %v563
      %565 = vmatmul.f32.gmra.mxu0 %v521
      %v566 = vpop.f32.mrf.mxu0
      %v567 = vadd.f32 %v544, %v566
      %568 = vmatmul.f32.gmra.mxu0 %v522
      %v569 = vpop.f32.mrf.mxu0
      %v570 = vadd.f32 %v544, %v569
      %571 = vmatmul.f32.gmra.mxu0 %v523
      %v572 = vpop.f32.mrf.mxu0
      %v573 = vadd.f32 %v544, %v572
      %574 = vdwg.mxu0
      %v575 = vmul.f32 %v564, 0.31830987
      %v576 = vmul.f32 %v567, 0.31830987
      %v577 = vmul.f32 %v570, 0.31830987
      %v578 = vmul.f32 %v573, 0.31830987
      %v579 = vadd.f32 %v575, 0.5
      %v580 = vadd.f32 %v576, 0.5
      %v581 = vadd.f32 %v577, 0.5
      %v582 = vadd.f32 %v578, 0.5
      %v583 = vfloor.f32 %v579
      %v584 = vfloor.f32 %v580
      %v585 = vfloor.f32 %v581
      %v586 = vfloor.f32 %v582
      %v587 = vmul.f32 %v583, 3.140625
      %v588 = vmul.f32 %v584, 3.140625
      %v589 = vmul.f32 %v585, 3.140625
      %v590 = vmul.f32 %v586, 3.140625
      %v591 = vsub.f32 %v564, %v587
      %v592 = vsub.f32 %v567, %v588
      %v593 = vsub.f32 %v570, %v589
      %v594 = vsub.f32 %v573, %v590
      %v595 = vmul.f32 %v583, 0.0009676536
      %v596 = vmul.f32 %v584, 0.0009676536
      %v597 = vmul.f32 %v585, 0.0009676536
      %v598 = vmul.f32 %v586, 0.0009676536
      %v599 = vsub.f32 %v591, %v595
      %v600 = vsub.f32 %v592, %v596
      %v601 = vsub.f32 %v593, %v597
      %v602 = vsub.f32 %v594, %v598
      %v603 = vmul.f32 %v599, %v599
      %v604 = vmul.f32 %v600, %v600
      %v605 = vmul.f32 %v601, %v601
      %v606 = vmul.f32 %v602, %v602
      %v607 = vmul.f32 %v603, -2.5052108e-08
      %v608 = vmul.f32 %v604, -2.5052108e-08
      %v609 = vmul.f32 %v605, -2.5052108e-08
      %v610 = vmul.f32 %v606, -2.5052108e-08
      %v611 = vadd.f32 %v607, 2.7557319e-06
      %v612 = vadd.f32 %v608, 2.7557319e-06
      %v613 = vadd.f32 %v609, 2.7557319e-06
      %v614 = vadd.f32 %v610, 2.7557319e-06
      %v615 = vmul.f32 %v611, %v603
      %v616 = vmul.f32 %v612, %v604
      %v617 = vmul.f32 %v613, %v605
      %v618 = vmul.f32 %v614, %v606
      %v619 = vadd.f32 %v615, -0.0001984127
      %v620 = vadd.f32 %v616, -0.0001984127
      %v621 = vadd.f32 %v617, -0.0001984127
      %v622 = vadd.f32 %v618, -0.0001984127
      %v623 = vmul.f32 %v619, %v603
      %v624 = vmul.f32 %v620, %v604
      %v625 = vmul.f32 %v621, %v605
      %v626 = vmul.f32 %v622, %v606
      %v627 = vadd.f32 %v623, 0.008333334
      %v628 = vadd.f32 %v624, 0.008333334
      %v629 = vadd.f32 %v625, 0.008333334
      %v630 = vadd.f32 %v626, 0.008333334
      %v631 = vmul.f32 %v627, %v603
      %v632 = vmul.f32 %v628, %v604
      %v633 = vmul.f32 %v629, %v605
      %v634 = vmul.f32 %v630, %v606
      %v635 = vadd.f32 %v631, -0.16666667
      %v636 = vadd.f32 %v632, -0.16666667
      %v637 = vadd.f32 %v633, -0.16666667
      %v638 = vadd.f32 %v634, -0.16666667
      %v639 = vmul.f32 %v599, %v603
      %v640 = vmul.f32 %v600, %v604
      %v641 = vmul.f32 %v601, %v605
      %v642 = vmul.f32 %v602, %v606
      %v643 = vmul.f32 %v639, %v635
      %v644 = vmul.f32 %v640, %v636
      %v645 = vmul.f32 %v641, %v637
      %v646 = vmul.f32 %v642, %v638
      %v647 = vadd.f32 %v599, %v643
      %v648 = vadd.f32 %v600, %v644
      %v649 = vadd.f32 %v601, %v645
      %v650 = vadd.f32 %v602, %v646
      %v651 = vcvt.f32.s32.to.zero.pseudo %v583
      %v652 = vcvt.f32.s32.to.zero.pseudo %v584
      %v653 = vcvt.f32.s32.to.zero.pseudo %v585
      %v654 = vcvt.f32.s32.to.zero.pseudo %v586
      %v655 = vand.u32 %v651, 1
      %v656 = vand.u32 %v652, 1
      %v657 = vand.u32 %v653, 1
      %v658 = vand.u32 %v654, 1
      %vm659 = vcmp.eq.s32.totalorder %v655, 1
      %vm660 = vcmp.eq.s32.totalorder %v656, 1
      %vm661 = vcmp.eq.s32.totalorder %v657, 1
      %vm662 = vcmp.eq.s32.totalorder %v658, 1
      %v663 = vsub.f32 0.0, %v647
      %v664 = vsub.f32 0.0, %v648
      %v665 = vsub.f32 0.0, %v649
      %v666 = vsub.f32 0.0, %v650
      %v667 = vsel %vm659, %v663, %v647
      %v668 = vsel %vm660, %v664, %v648
      %v669 = vsel %vm661, %v665, %v649
      %v670 = vsel %vm662, %v666, %v650
      %v671 = vld [vmem:[%s3] sm:$0xff]
      %v672 = vld [vmem:[%s3 + $0x8] sm:$0xff]
      %v673 = vld [vmem:[%s3 + $0x10] sm:$0xff]
      %v674 = vld [vmem:[%s3 + $0x18] sm:$0xff]
      %v675 = vld [vmem:[%s3 + $0x20] sm:$0xff]
      %v676 = vld [vmem:[%s3 + $0x28] sm:$0xff]
      %v677 = vld [vmem:[%s3 + $0x30] sm:$0xff]
      %v678 = vld [vmem:[%s3 + $0x38] sm:$0xff]
      %v679 = vld [vmem:[%s3 + $0x40] sm:$0xff]
      %v680 = vld [vmem:[%s3 + $0x48] sm:$0xff]
      %v681 = vld [vmem:[%s3 + $0x50] sm:$0xff]
      %v682 = vld [vmem:[%s3 + $0x58] sm:$0xff]
      %v683 = vld [vmem:[%s3 + $0x60] sm:$0xff]
      %v684 = vld [vmem:[%s3 + $0x68] sm:$0xff]
      %v685 = vld [vmem:[%s3 + $0x70] sm:$0xff]
      %v686 = vld [vmem:[%s3 + $0x78] sm:$0xff]
      %v687 = vld [vmem:[%s4] sm:$0x1]
      %v689 = vperm.slane %v687, 0
      %691 = vmatpush.msra.mxu0 %v686
      %692 = vmatpush.msra.mxu0 %v685
      %693 = vmatpush.msra.mxu0 %v684
      %694 = vmatpush.msra.mxu0 %v683
      %695 = vmatpush.msra.mxu0 %v682
      %696 = vmatpush.msra.mxu0 %v681
      %697 = vmatpush.msra.mxu0 %v680
      %698 = vmatpush.msra.mxu0 %v679
      %699 = vmatpush.msra.mxu0 %v678
      %700 = vmatpush.msra.mxu0 %v677
      %701 = vmatpush.msra.mxu0 %v676
      %702 = vmatpush.msra.mxu0 %v675
      %703 = vmatpush.msra.mxu0 %v674
      %704 = vmatpush.msra.mxu0 %v673
      %705 = vmatpush.msra.mxu0 %v672
      %706 = vmatpush.msra.mxu0 %v671
      %707 = vmatmul.f32.gmra.mxu0 %v667
      %v708 = vpop.f32.mrf.mxu0
      %v709 = vadd.f32 %v689, %v708
      %710 = vmatmul.f32.gmra.mxu0 %v668
      %v711 = vpop.f32.mrf.mxu0
      %v712 = vadd.f32 %v689, %v711
      %713 = vmatmul.f32.gmra.mxu0 %v669
      %v714 = vpop.f32.mrf.mxu0
      %v715 = vadd.f32 %v689, %v714
      %716 = vmatmul.f32.gmra.mxu0 %v670
      %v717 = vpop.f32.mrf.mxu0
      %v718 = vadd.f32 %v689, %v717
      %719 = vdwg.mxu0
      %vm720 = vcmask 261120
      %721 = vst.msk [vmem:[%s226] sm:$0xff] %vm720, %v709
      %722 = vst.msk [vmem:[%s226 + $0x8] sm:$0xff] %vm720, %v712
      %723 = vst.msk [vmem:[%s226 + $0x10] sm:$0xff] %vm720, %v715
      %724 = vst.msk [vmem:[%s226 + $0x18] sm:$0xff] %vm720, %v718
      %s725 = smul.u32 4, %s16
      %p726 = scmp.lt.s32.totalorder %s725, 7
      %s727 = scalar_select %p726, %s725, 7
      %s728 = smul.addr %s727, 8
      %s729 = scalar_lea.vmem %s5, %s728
      // Predicated region
      $region41: #{siren_forward.1} parent=39 // pred_check
        %p730 = pneg %p144
      $region42: #{siren_forward.1} parent=39 // pred_check_branch
        %732 = sbr.rel (%p730) target = $region44
      $region43: #{siren_forward.1} parent=39 // pred_region
        %s733 = smul.u32 4, %s16
      $region44: #{siren_forward.1} parent=39 // pred_fallthru
        _
    $region40: #{siren_forward.1} parent=5 // pred_fallthru
      _
    %p734 = scmp.le.s32.totalorder 2, %s11
    // Predicated region
    $region45: #{siren_forward.1} parent=5 // pred_check
      %p735 = pneg %p734
    $region46: #{siren_forward.1} parent=5 // pred_check_branch
      %737 = sbr.rel (%p735) target = $region48
    $region47: #{siren_forward.1} parent=5 // pred_region
      %s738 = ssub.s32 %s11, 2
      // Predicated region
      $region49: #{siren_forward.1} parent=47 // pred_check
        %p739 = pneg %p150
      $region50: #{siren_forward.1} parent=47 // pred_check_branch
        %741 = sbr.rel (%p739) target = $region52
      $region51: #{siren_forward.1} parent=47 // pred_region
        %s742 = smul.u32 4, %s17
        %p743 = scmp.lt.s32.totalorder %s742, 7
        %s744 = scalar_select %p743, %s742, 7
        %s745 = smul.addr %s744, 8
        %s746 = scalar_lea.vmem %s5, %s745
      $region52: #{siren_forward.1} parent=47 // pred_fallthru
        _
    $region48: #{siren_forward.1} parent=5 // pred_fallthru
      _
  $region6: #{siren_forward.1} parent=0 // loop_footer
    %s15 = sadd.s32 1, %s11
  $region7: #{siren_forward.1} parent=0 // loop_footer_branch
    %10 = sbr.rel target = $region3
  $region8: #{siren_forward.1} parent=0 // loop_exit
    _

</llo_original>
